<compile_context>
chip_gen: v7x
topology: tpu7x:2x2x1
jax: 0.10.0
libtpu: 0.0.40
codegen_flags: <defaults>
</compile_context>

<pallas_src>
import functools

import jax
import jax.numpy as jnp
from jax.experimental import pallas as pl
from jax.experimental.pallas import tpu as pltpu


def _round_up(x, m):
    return ((x + m - 1) // m) * m


def _default_tpu_config():
    """Best-effort per-generation defaults: (row_block, num_splits, vmem_limit)."""
    kind = ""
    try:
        kind = jax.devices()[0].device_kind.lower()
    except Exception:
        pass
    if "v5 lite" in kind or "v5e" in kind or "v5lite" in kind:
        return 256, 1, 32 << 20        # v5e: scoped default is only 16 MiB
    if "v6" in kind:
        return 512, 1, 48 << 20        # v6e: HBM-bound, big tiles hit roofline
    if "v7" in kind or "tpu7" in kind:
        return 256, 2, 40 << 20        # v7x: 2 TCs, 64 MiB physical VMEM
    return 256, 1, 32 << 20            # safe everywhere


def _yolo_v1_loss_kernel(preds_ref, targets_ref, ious_ref, out_ref, acc_ref, *,
                         num_boxes, num_classes, batch_size,
                         lambda_coord, lambda_object_exists,
                         lambda_no_object, lambda_class):
    C = num_classes
    B = num_boxes
    j = pl.program_id(1)

    f32 = jnp.float32
    one = f32(1.0)
    zero = f32(0.0)

    # --- init running per-lane accumulators once per "parallel" split.
    @pl.when(j == 0)
    def _init():
        acc_ref[...] = jnp.zeros_like(acc_ref)

    # Per-channel loads, upcast to f32 at point of use (inputs may be bf16).
    def pch(c):                         # preds channel c   -> (rb, 128) f32
        return preds_ref[c].astype(f32)

    def tch(c):                         # targets channel c -> (rb, 128) f32
        return targets_ref[c].astype(f32)

    obj = tch(C)                        # 0/1 object-exists mask

    # --- responsibility: one-hot of argmax over the box axis (first-max
    # tie-break, matching torch/jnp argmax), times the object mask.  Exact
    # equality compare is safe because max_iou is built from the same values.
    iou = [ious_ref[i].astype(f32) for i in range(B)]
    max_iou = iou[0]
    for i in range(1, B):
        max_iou = jnp.maximum(max_iou, iou[i])
    resp = []
    taken = jnp.zeros_like(obj)
    for i in range(B):
        is_best = jnp.where((iou[i] >= max_iou) & (taken < 0.5), one, zero)
        taken = taken + is_best
        resp.append(is_best * obj)

    # --- coordinate / confidence / no-object losses per responsible box.
    x = tch(C + 1)
    y = tch(C + 2)
    w_s = jnp.sqrt(jnp.abs(tch(C + 3)))
    h_s = jnp.sqrt(jnp.abs(tch(C + 4)))

    coords_col = jnp.zeros_like(obj)
    conf_col = jnp.zeros_like(obj)
    neg_col = jnp.zeros_like(obj)
    for i in range(B):
        s = C + i * 5
        c_hat = pch(s)
        x_hat = pch(s + 1)
        y_hat = pch(s + 2)
        w_hat_s = jnp.sqrt(jnp.abs(pch(s + 3)))
        h_hat_s = jnp.sqrt(jnp.abs(pch(s + 4)))
        per_cell = ((x_hat - x) ** 2 + (y_hat - y) ** 2
                    + (w_hat_s - w_s) ** 2 + (h_hat_s - h_s) ** 2)
        coords_col = coords_col + resp[i] * per_cell
        conf_col = conf_col + resp[i] * (c_hat - iou[i]) ** 2
        neg_col = neg_col + (one - resp[i]) * (c_hat * c_hat)

    # --- class loss: small loop over class channels (no bulk channel extract).
    cls_sq = jnp.zeros_like(obj)
    for c in range(C):
        d = pch(c) - tch(c)
        cls_sq = cls_sq + d * d
    cls_col = obj * cls_sq

    # --- per-step sublane reduce (XLU) into a tiny (4, 128) accumulator; the
    # cross-lane reduce + 1/N + lambda weighting happen once in finalize.
    acc_ref[0:1, :] += jnp.sum(coords_col, axis=0, keepdims=True)
    acc_ref[1:2, :] += jnp.sum(conf_col, axis=0, keepdims=True)
    acc_ref[2:3, :] += jnp.sum(neg_col, axis=0, keepdims=True)
    acc_ref[3:4, :] += jnp.sum(cls_col, axis=0, keepdims=True)

    # --- finalize: one cross-lane reduce per loss term.
    @pl.when(j == pl.num_programs(1) - 1)
    def _finalize():
        inv_n = f32(1.0 / batch_size)
        coords = jnp.sum(acc_ref[0:1, :]) * inv_n
        conf = jnp.sum(acc_ref[1:2, :]) * inv_n
        neg = jnp.sum(acc_ref[2:3, :]) * inv_n
        cls = jnp.sum(acc_ref[3:4, :]) * inv_n
        final = (coords * lambda_coord + conf * lambda_object_exists
                 + neg * lambda_no_object + cls * lambda_class)
        lane = jax.lax.broadcasted_iota(jnp.int32, out_ref.shape, 2)
        row = jnp.where(lane == 0, final,
              jnp.where(lane == 1, coords,
              jnp.where(lane == 2, conf,
              jnp.where(lane == 3, neg,
              jnp.where(lane == 4, cls, zero)))))
        out_ref[...] = row.astype(out_ref.dtype)


def yolo_v1_loss(preds, targets, ious, *, num_boxes, num_classes,
                 lambda_coord=5.0, lambda_object_exists=1.0,
                 lambda_no_object=0.5, lambda_class=1.0,
                 row_block=None, num_splits=None, vmem_limit_bytes=None):
    """Pallas-backed YoloV1Loss.forward; returns the same dict of scalars.

    preds   : (N, C + B*5, S, S)
    targets : (N, C + 5,   S, S)   channel C is the 0/1 object mask
    ious    : (N, B,       S, S)
    Inputs may be f32 or bf16; all arithmetic is done in f32 in-kernel.
    Call this under jax.jit so the channel-major re-layout fuses with the
    kernel's surrounding copies.
    """
    N, ch_p, s1, s2 = preds.shape
    ch_t = targets.shape[1]
    B = num_boxes
    L = N * s1 * s2

    rb_def, splits_def, vmem_def = _default_tpu_config()
    if row_block is None:
        row_block = rb_def
    if num_splits is None:
        num_splits = splits_def
    if vmem_limit_bytes is None:
        vmem_limit_bytes = vmem_def

    # --- channel-major, lane-dense re-layout (pure layout plumbing).
    preds2 = jnp.transpose(preds, (1, 0, 2, 3)).reshape(ch_p, L)
    targets2 = jnp.transpose(targets, (1, 0, 2, 3)).reshape(ch_t, L)
    ious2 = jnp.transpose(ious, (1, 0, 2, 3)).reshape(B, L)

    n_rows = pl.cdiv(L, 128)
    rows_per_split = pl.cdiv(n_rows, num_splits)
    rb = min(row_block, _round_up(rows_per_split, 8))     # multiple of 8
    if rows_per_split > 8 and pl.cdiv(rows_per_split, rb) < 2:
        # keep >= 2 inner steps per split so DMA of block i+1 hides under
        # compute of block i (matters most on v7x's faster HBM).
        rb = _round_up(pl.cdiv(rows_per_split, 2), 8)
    n_inner = pl.cdiv(rows_per_split, rb)
    n_rows_pad = num_splits * n_inner * rb
    L_pad = n_rows_pad * 128
    if L_pad != L:
        # Zero-padding is exact: obj mask, responsibilities and preds are all
        # zero in the padding, so every loss term contributes 0 there.
        pad = ((0, 0), (0, L_pad - L))
        preds2 = jnp.pad(preds2, pad)
        targets2 = jnp.pad(targets2, pad)
        ious2 = jnp.pad(ious2, pad)
    preds2 = preds2.reshape(ch_p, n_rows_pad, 128)
    targets2 = targets2.reshape(ch_t, n_rows_pad, 128)
    ious2 = ious2.reshape(B, n_rows_pad, 128)

    kernel = functools.partial(
        _yolo_v1_loss_kernel,
        num_boxes=B, num_classes=num_classes, batch_size=N,
        lambda_coord=float(lambda_coord),
        lambda_object_exists=float(lambda_object_exists),
        lambda_no_object=float(lambda_no_object),
        lambda_class=float(lambda_class))

    col_map = lambda i, j: (0, i * n_inner + j, 0)

    bytes_accessed = int(preds2.size * preds2.dtype.itemsize
                         + targets2.size * targets2.dtype.itemsize
                         + ious2.size * ious2.dtype.itemsize)
    cost = pl.CostEstimate(
        flops=int((22 * B + 3 * num_classes + 12) * L_pad),
        transcendentals=int((2 + 2 * B) * L_pad),
        bytes_accessed=bytes_accessed)

    out = pl.pallas_call(
        kernel,
        out_shape=jax.ShapeDtypeStruct((num_splits, 8, 128), jnp.float32),
        grid_spec=pltpu.PrefetchScalarGridSpec(
            num_scalar_prefetch=0,
            grid=(num_splits, n_inner),
            in_specs=[pl.BlockSpec((ch_p, rb, 128), col_map),
                      pl.BlockSpec((ch_t, rb, 128), col_map),
                      pl.BlockSpec((B, rb, 128), col_map)],
            out_specs=pl.BlockSpec((1, 8, 128), lambda i, j: (i, 0, 0)),
            scratch_shapes=[pltpu.VMEM((4, 128), jnp.float32)]),
        compiler_params=pltpu.CompilerParams(
            dimension_semantics=("parallel", "arbitrary"),
            vmem_limit_bytes=int(vmem_limit_bytes)),
        cost_estimate=cost,
    )(preds2, targets2, ious2)

    # Combine per-split (per-TensorCore) partials: all terms are linear, so
    # summing the already-weighted scalars is exact.
    vals = jnp.sum(out[:, 0, :5], axis=0)
    return {
        "loss": vals[0],
        "loss_coords": vals[1],
        "loss_confidence": vals[2],
        "loss_confidence_negative": vals[3],
        "loss_class": vals[4],
    }


def yolo_v1_loss_ref(preds, targets, ious, *, num_boxes, num_classes,
                     lambda_coord=5.0, lambda_object_exists=1.0,
                     lambda_no_object=0.5, lambda_class=1.0):
    """Pure-JAX reference mirroring the PyTorch module (for verification)."""
    C, B = num_classes, num_boxes
    obj = targets[:, C]
    resp = jax.nn.one_hot(jnp.argmax(ious, axis=1), B, axis=1)
    resp = resp * obj[:, None]

    x, y = targets[:, C + 1], targets[:, C + 2]
    w_s = jnp.sqrt(jnp.abs(targets[:, C + 3]))
    h_s = jnp.sqrt(jnp.abs(targets[:, C + 4]))
    coords = 0.0
    for i in range(B):
        s = C + i * 5
        xh, yh = preds[:, s + 1], preds[:, s + 2]
        whs, hhs = jnp.sqrt(jnp.abs(preds[:, s + 3])), jnp.sqrt(jnp.abs(preds[:, s + 4]))
        per = (xh - x) ** 2 + (yh - y) ** 2 + (whs - w_s) ** 2 + (hhs - h_s) ** 2
        coords = coords + jnp.mean(jnp.sum(resp[:, i] * per, axis=(1, 2)))

    conf_idx = [C + i * 5 for i in range(B)]
    c_hat = preds[:, jnp.array(conf_idx)]
    conf = jnp.mean(jnp.sum(resp * (c_hat - ious) ** 2, axis=(1, 2, 3)))
    neg = jnp.mean(jnp.sum((1.0 - resp) * (c_hat ** 2), axis=(1, 2, 3)))
    cls = jnp.mean(jnp.sum(obj * jnp.sum((preds[:, :C] - targets[:, :C]) ** 2, axis=1),
                           axis=(1, 2)))
    final = (coords * lambda_coord + conf * lambda_object_exists
             + neg * lambda_no_object + cls * lambda_class)
    return {"loss": final, "loss_coords": coords, "loss_confidence": conf,
            "loss_confidence_negative": neg, "loss_class": cls}


def _make_inputs(key, N, B, C, S, dtype=jnp.float32):
    k1, k2, k3, k4 = jax.random.split(key, 4)
    preds = jax.random.normal(k1, (N, C + B * 5, S, S), dtype=dtype)
    targets = jax.random.uniform(k2, (N, C + 5, S, S), dtype=dtype)
    obj_mask = (jax.random.uniform(k3, (N, S, S)) > 0.5).astype(dtype)
    targets = targets.at[:, C].set(obj_mask)  # 0/1 object-exists channel
    ious = jax.random.uniform(k4, (N, B, S, S), dtype=dtype)
    return preds, targets, ious


if __name__ == "__main__":
    lam_coord, lam_obj, lam_noobj, lam_class = 5.0, 1.0, 0.5, 1.0
    key = jax.random.PRNGKey(0)
    k_a, k_b = jax.random.split(key)

    # --- test 1: tiny config, auto (generation-aware) tiling, whole wrapper
    # jitted so the transpose/pad re-layout fuses with the kernel's copies.
    N, B, C, S = 2, 2, 4, 8
    preds, targets, ious = _make_inputs(k_a, N, B, C, S)
    loss_fn = jax.jit(functools.partial(
        yolo_v1_loss, num_boxes=B, num_classes=C,
        lambda_coord=lam_coord, lambda_object_exists=lam_obj,
        lambda_no_object=lam_noobj, lambda_class=lam_class))
    out = loss_fn(preds, targets, ious)
    jax.block_until_ready(out)
    ref = yolo_v1_loss_ref(preds, targets, ious, num_boxes=B, num_classes=C,
                           lambda_coord=lam_coord, lambda_object_exists=lam_obj,
                           lambda_no_object=lam_noobj, lambda_class=lam_class)
    for name in out:
        assert jnp.allclose(out[name], ref[name], rtol=1e-4, atol=1e-4), (
            "test1", name, out[name], ref[name])

    # --- test 2: bigger config with explicit small row_block / 2 splits so
    # the multi-step grid + per-split accumulation path is exercised on any
    # generation.
    N2, B2, C2, S2 = 4, 2, 20, 32
    preds2, targets2, ious2 = _make_inputs(k_b, N2, B2, C2, S2)
    out2 = yolo_v1_loss(preds2, targets2, ious2, num_boxes=B2, num_classes=C2,
                        lambda_coord=lam_coord, lambda_object_exists=lam_obj,
                        lambda_no_object=lam_noobj, lambda_class=lam_class,
                        row_block=8, num_splits=2)
    jax.block_until_ready(out2)
    ref2 = yolo_v1_loss_ref(preds2, targets2, ious2, num_boxes=B2, num_classes=C2,
                            lambda_coord=lam_coord, lambda_object_exists=lam_obj,
                            lambda_no_object=lam_noobj, lambda_class=lam_class)
    for name in out2:
        assert jnp.allclose(out2[name], ref2[name], rtol=1e-4, atol=1e-4), (
            "test2", name, out2[name], ref2[name])

    print("KERNEL_OK")
</pallas_src>

<mosaic_0001>
module attributes {stable_mosaic.version = 11 : i64} {
  func.func @_yolo_v1_loss_kernel(%arg0: i32, %arg1: i32, %arg2: memref<14x8x128xf32, #tpu.memory_space<vmem>>, %arg3: memref<9x8x128xf32, #tpu.memory_space<vmem>>, %arg4: memref<2x8x128xf32, #tpu.memory_space<vmem>>, %arg5: memref<1x8x128xf32, #tpu.memory_space<vmem>>, %arg6: memref<4x128xf32, #tpu.memory_space<vmem>>) attributes {dimension_semantics = [#tpu.dimension_semantics<parallel>, #tpu.dimension_semantics<arbitrary>], iteration_bounds = array<i64: 1, 1>, scalar_prefetch = 0 : i64, scratch_operands = 1 : i64, tpu.core_type = #tpu.core_type<tc>, window_params = [{transform_indices = @transform_0, window_bounds = array<i64: 14, 8, 128>}, {transform_indices = @transform_1, window_bounds = array<i64: 9, 8, 128>}, {transform_indices = @transform_2, window_bounds = array<i64: 2, 8, 128>}, {transform_indices = @transform_3, window_bounds = array<i64: 1, 8, 128>}]} {
    %c0_i32 = arith.constant 0 : i32
    %0 = arith.cmpi eq, %arg1, %c0_i32 : i32
    %1 = arith.extui %0 : i1 to i32
    %c0_i32_0 = arith.constant 0 : i32
    %2 = arith.cmpi ne, %1, %c0_i32_0 : i32
    scf.if %2 {
      %cst_97 = arith.constant 0.000000e+00 : f32
      %168 = vector.broadcast %cst_97 : f32 to vector<4x128xf32>
      %c0_98 = arith.constant 0 : index
      %c0_99 = arith.constant 0 : index
      %169 = vector.load %arg6[%c0_98, %c0_99] : memref<4x128xf32, #tpu.memory_space<vmem>>, vector<4x128xf32>
      tpu.vector_store %arg6[%c0_98, %c0_99], %168 {strides = array<i32>} : memref<4x128xf32, #tpu.memory_space<vmem>>, vector<4x128xf32>,
    } else {
    }
    %c4 = arith.constant 4 : index
    %c0 = arith.constant 0 : index
    %c0_1 = arith.constant 0 : index
    %3 = vector.load %arg3[%c4, %c0, %c0_1] : memref<9x8x128xf32, #tpu.memory_space<vmem>>, vector<1x8x128xf32>
    %4 = vector.shape_cast %3 : vector<1x8x128xf32> to vector<8x128xf32>
    %c0_2 = arith.constant 0 : index
    %c0_3 = arith.constant 0 : index
    %c0_4 = arith.constant 0 : index
    %5 = vector.load %arg4[%c0_2, %c0_3, %c0_4] : memref<2x8x128xf32, #tpu.memory_space<vmem>>, vector<1x8x128xf32>
    %6 = vector.shape_cast %5 : vector<1x8x128xf32> to vector<8x128xf32>
    %c1 = arith.constant 1 : index
    %c0_5 = arith.constant 0 : index
    %c0_6 = arith.constant 0 : index
    %7 = vector.load %arg4[%c1, %c0_5, %c0_6] : memref<2x8x128xf32, #tpu.memory_space<vmem>>, vector<1x8x128xf32>
    %8 = vector.shape_cast %7 : vector<1x8x128xf32> to vector<8x128xf32>
    %9 = arith.maximumf %6, %8 : vector<8x128xf32>
    %cst = arith.constant 0.000000e+00 : f32
    %10 = vector.broadcast %cst : f32 to vector<8x128xf32>
    %11 = arith.cmpf oge, %6, %9 : vector<8x128xf32>
    %cst_7 = arith.constant 5.000000e-01 : f32
    %12 = vector.broadcast %cst_7 : f32 to vector<8x128xf32>
    %13 = arith.cmpf olt, %10, %12 : vector<8x128xf32>
    %14 = arith.andi %11, %13 : vector<8x128xi1>
    %cst_8 = arith.constant 1.000000e+00 : f32
    %cst_9 = arith.constant 0.000000e+00 : f32
    %15 = vector.broadcast %cst_8 : f32 to vector<8x128xf32>
    %16 = vector.broadcast %cst_9 : f32 to vector<8x128xf32>
    %17 = arith.select %14, %15, %16 : vector<8x128xi1>, vector<8x128xf32>
    %18 = arith.addf %10, %17 : vector<8x128xf32>
    %19 = arith.mulf %17, %4 : vector<8x128xf32>
    %20 = arith.cmpf oge, %8, %9 : vector<8x128xf32>
    %cst_10 = arith.constant 5.000000e-01 : f32
    %21 = vector.broadcast %cst_10 : f32 to vector<8x128xf32>
    %22 = arith.cmpf olt, %18, %21 : vector<8x128xf32>
    %23 = arith.andi %20, %22 : vector<8x128xi1>
    %cst_11 = arith.constant 1.000000e+00 : f32
    %cst_12 = arith.constant 0.000000e+00 : f32
    %24 = vector.broadcast %cst_11 : f32 to vector<8x128xf32>
    %25 = vector.broadcast %cst_12 : f32 to vector<8x128xf32>
    %26 = arith.select %23, %24, %25 : vector<8x128xi1>, vector<8x128xf32>
    %27 = arith.mulf %26, %4 : vector<8x128xf32>
    %c5 = arith.constant 5 : index
    %c0_13 = arith.constant 0 : index
    %c0_14 = arith.constant 0 : index
    %28 = vector.load %arg3[%c5, %c0_13, %c0_14] : memref<9x8x128xf32, #tpu.memory_space<vmem>>, vector<1x8x128xf32>
    %29 = vector.shape_cast %28 : vector<1x8x128xf32> to vector<8x128xf32>
    %c6 = arith.constant 6 : index
    %c0_15 = arith.constant 0 : index
    %c0_16 = arith.constant 0 : index
    %30 = vector.load %arg3[%c6, %c0_15, %c0_16] : memref<9x8x128xf32, #tpu.memory_space<vmem>>, vector<1x8x128xf32>
    %31 = vector.shape_cast %30 : vector<1x8x128xf32> to vector<8x128xf32>
    %c7 = arith.constant 7 : index
    %c0_17 = arith.constant 0 : index
    %c0_18 = arith.constant 0 : index
    %32 = vector.load %arg3[%c7, %c0_17, %c0_18] : memref<9x8x128xf32, #tpu.memory_space<vmem>>, vector<1x8x128xf32>
    %33 = vector.shape_cast %32 : vector<1x8x128xf32> to vector<8x128xf32>
    %34 = math.absf %33 : vector<8x128xf32>
    %35 = math.sqrt %34 : vector<8x128xf32>
    %c8 = arith.constant 8 : index
    %c0_19 = arith.constant 0 : index
    %c0_20 = arith.constant 0 : index
    %36 = vector.load %arg3[%c8, %c0_19, %c0_20] : memref<9x8x128xf32, #tpu.memory_space<vmem>>, vector<1x8x128xf32>
    %37 = vector.shape_cast %36 : vector<1x8x128xf32> to vector<8x128xf32>
    %38 = math.absf %37 : vector<8x128xf32>
    %39 = math.sqrt %38 : vector<8x128xf32>
    %cst_21 = arith.constant 0.000000e+00 : f32
    %40 = vector.broadcast %cst_21 : f32 to vector<8x128xf32>
    %cst_22 = arith.constant 0.000000e+00 : f32
    %41 = vector.broadcast %cst_22 : f32 to vector<8x128xf32>
    %cst_23 = arith.constant 0.000000e+00 : f32
    %42 = vector.broadcast %cst_23 : f32 to vector<8x128xf32>
    %c4_24 = arith.constant 4 : index
    %c0_25 = arith.constant 0 : index
    %c0_26 = arith.constant 0 : index
    %43 = vector.load %arg2[%c4_24, %c0_25, %c0_26] : memref<14x8x128xf32, #tpu.memory_space<vmem>>, vector<1x8x128xf32>
    %44 = vector.shape_cast %43 : vector<1x8x128xf32> to vector<8x128xf32>
    %c5_27 = arith.constant 5 : index
    %c0_28 = arith.constant 0 : index
    %c0_29 = arith.constant 0 : index
    %45 = vector.load %arg2[%c5_27, %c0_28, %c0_29] : memref<14x8x128xf32, #tpu.memory_space<vmem>>, vector<1x8x128xf32>
    %46 = vector.shape_cast %45 : vector<1x8x128xf32> to vector<8x128xf32>
    %c6_30 = arith.constant 6 : index
    %c0_31 = arith.constant 0 : index
    %c0_32 = arith.constant 0 : index
    %47 = vector.load %arg2[%c6_30, %c0_31, %c0_32] : memref<14x8x128xf32, #tpu.memory_space<vmem>>, vector<1x8x128xf32>
    %48 = vector.shape_cast %47 : vector<1x8x128xf32> to vector<8x128xf32>
    %c7_33 = arith.constant 7 : index
    %c0_34 = arith.constant 0 : index
    %c0_35 = arith.constant 0 : index
    %49 = vector.load %arg2[%c7_33, %c0_34, %c0_35] : memref<14x8x128xf32, #tpu.memory_space<vmem>>, vector<1x8x128xf32>
    %50 = vector.shape_cast %49 : vector<1x8x128xf32> to vector<8x128xf32>
    %51 = math.absf %50 : vector<8x128xf32>
    %52 = math.sqrt %51 : vector<8x128xf32>
    %c8_36 = arith.constant 8 : index
    %c0_37 = arith.constant 0 : index
    %c0_38 = arith.constant 0 : index
    %53 = vector.load %arg2[%c8_36, %c0_37, %c0_38] : memref<14x8x128xf32, #tpu.memory_space<vmem>>, vector<1x8x128xf32>
    %54 = vector.shape_cast %53 : vector<1x8x128xf32> to vector<8x128xf32>
    %55 = math.absf %54 : vector<8x128xf32>
    %56 = math.sqrt %55 : vector<8x128xf32>
    %57 = arith.subf %46, %29 : vector<8x128xf32>
    %58 = arith.mulf %57, %57 : vector<8x128xf32>
    %59 = arith.subf %48, %31 : vector<8x128xf32>
    %60 = arith.mulf %59, %59 : vector<8x128xf32>
    %61 = arith.addf %58, %60 : vector<8x128xf32>
    %62 = arith.subf %52, %35 : vector<8x128xf32>
    %63 = arith.mulf %62, %62 : vector<8x128xf32>
    %64 = arith.addf %61, %63 : vector<8x128xf32>
    %65 = arith.subf %56, %39 : vector<8x128xf32>
    %66 = arith.mulf %65, %65 : vector<8x128xf32>
    %67 = arith.addf %64, %66 : vector<8x128xf32>
    %68 = arith.mulf %19, %67 : vector<8x128xf32>
    %69 = arith.addf %40, %68 : vector<8x128xf32>
    %70 = arith.subf %44, %6 : vector<8x128xf32>
    %71 = arith.mulf %70, %70 : vector<8x128xf32>
    %72 = arith.mulf %19, %71 : vector<8x128xf32>
    %73 = arith.addf %41, %72 : vector<8x128xf32>
    %cst_39 = arith.constant 1.000000e+00 : f32
    %74 = vector.broadcast %cst_39 : f32 to vector<8x128xf32>
    %75 = arith.subf %74, %19 : vector<8x128xf32>
    %76 = arith.mulf %44, %44 : vector<8x128xf32>
    %77 = arith.mulf %75, %76 : vector<8x128xf32>
    %78 = arith.addf %42, %77 : vector<8x128xf32>
    %c9 = arith.constant 9 : index
    %c0_40 = arith.constant 0 : index
    %c0_41 = arith.constant 0 : index
    %79 = vector.load %arg2[%c9, %c0_40, %c0_41] : memref<14x8x128xf32, #tpu.memory_space<vmem>>, vector<1x8x128xf32>
    %80 = vector.shape_cast %79 : vector<1x8x128xf32> to vector<8x128xf32>
    %c10 = arith.constant 10 : index
    %c0_42 = arith.constant 0 : index
    %c0_43 = arith.constant 0 : index
    %81 = vector.load %arg2[%c10, %c0_42, %c0_43] : memref<14x8x128xf32, #tpu.memory_space<vmem>>, vector<1x8x128xf32>
    %82 = vector.shape_cast %81 : vector<1x8x128xf32> to vector<8x128xf32>
    %c11 = arith.constant 11 : index
    %c0_44 = arith.constant 0 : index
    %c0_45 = arith.constant 0 : index
    %83 = vector.load %arg2[%c11, %c0_44, %c0_45] : memref<14x8x128xf32, #tpu.memory_space<vmem>>, vector<1x8x128xf32>
    %84 = vector.shape_cast %83 : vector<1x8x128xf32> to vector<8x128xf32>
    %c12 = arith.constant 12 : index
    %c0_46 = arith.constant 0 : index
    %c0_47 = arith.constant 0 : index
    %85 = vector.load %arg2[%c12, %c0_46, %c0_47] : memref<14x8x128xf32, #tpu.memory_space<vmem>>, vector<1x8x128xf32>
    %86 = vector.shape_cast %85 : vector<1x8x128xf32> to vector<8x128xf32>
    %87 = math.absf %86 : vector<8x128xf32>
    %88 = math.sqrt %87 : vector<8x128xf32>
    %c13 = arith.constant 13 : index
    %c0_48 = arith.constant 0 : index
    %c0_49 = arith.constant 0 : index
    %89 = vector.load %arg2[%c13, %c0_48, %c0_49] : memref<14x8x128xf32, #tpu.memory_space<vmem>>, vector<1x8x128xf32>
    %90 = vector.shape_cast %89 : vector<1x8x128xf32> to vector<8x128xf32>
    %91 = math.absf %90 : vector<8x128xf32>
    %92 = math.sqrt %91 : vector<8x128xf32>
    %93 = arith.subf %82, %29 : vector<8x128xf32>
    %94 = arith.mulf %93, %93 : vector<8x128xf32>
    %95 = arith.subf %84, %31 : vector<8x128xf32>
    %96 = arith.mulf %95, %95 : vector<8x128xf32>
    %97 = arith.addf %94, %96 : vector<8x128xf32>
    %98 = arith.subf %88, %35 : vector<8x128xf32>
    %99 = arith.mulf %98, %98 : vector<8x128xf32>
    %100 = arith.addf %97, %99 : vector<8x128xf32>
    %101 = arith.subf %92, %39 : vector<8x128xf32>
    %102 = arith.mulf %101, %101 : vector<8x128xf32>
    %103 = arith.addf %100, %102 : vector<8x128xf32>
    %104 = arith.mulf %27, %103 : vector<8x128xf32>
    %105 = arith.addf %69, %104 : vector<8x128xf32>
    %106 = arith.subf %80, %8 : vector<8x128xf32>
    %107 = arith.mulf %106, %106 : vector<8x128xf32>
    %108 = arith.mulf %27, %107 : vector<8x128xf32>
    %109 = arith.addf %73, %108 : vector<8x128xf32>
    %cst_50 = arith.constant 1.000000e+00 : f32
    %110 = vector.broadcast %cst_50 : f32 to vector<8x128xf32>
    %111 = arith.subf %110, %27 : vector<8x128xf32>
    %112 = arith.mulf %80, %80 : vector<8x128xf32>
    %113 = arith.mulf %111, %112 : vector<8x128xf32>
    %114 = arith.addf %78, %113 : vector<8x128xf32>
    %cst_51 = arith.constant 0.000000e+00 : f32
    %115 = vector.broadcast %cst_51 : f32 to vector<8x128xf32>
    %c0_52 = arith.constant 0 : index
    %c0_53 = arith.constant 0 : index
    %c0_54 = arith.constant 0 : index
    %116 = vector.load %arg2[%c0_52, %c0_53, %c0_54] : memref<14x8x128xf32, #tpu.memory_space<vmem>>, vector<1x8x128xf32>
    %117 = vector.shape_cast %116 : vector<1x8x128xf32> to vector<8x128xf32>
    %c0_55 = arith.constant 0 : index
    %c0_56 = arith.constant 0 : index
    %c0_57 = arith.constant 0 : index
    %118 = vector.load %arg3[%c0_55, %c0_56, %c0_57] : memref<9x8x128xf32, #tpu.memory_space<vmem>>, vector<1x8x128xf32>
    %119 = vector.shape_cast %118 : vector<1x8x128xf32> to vector<8x128xf32>
    %120 = arith.subf %117, %119 : vector<8x128xf32>
    %121 = arith.mulf %120, %120 : vector<8x128xf32>
    %122 = arith.addf %115, %121 : vector<8x128xf32>
    %c1_58 = arith.constant 1 : index
    %c0_59 = arith.constant 0 : index
    %c0_60 = arith.constant 0 : index
    %123 = vector.load %arg2[%c1_58, %c0_59, %c0_60] : memref<14x8x128xf32, #tpu.memory_space<vmem>>, vector<1x8x128xf32>
    %124 = vector.shape_cast %123 : vector<1x8x128xf32> to vector<8x128xf32>
    %c1_61 = arith.constant 1 : index
    %c0_62 = arith.constant 0 : index
    %c0_63 = arith.constant 0 : index
    %125 = vector.load %arg3[%c1_61, %c0_62, %c0_63] : memref<9x8x128xf32, #tpu.memory_space<vmem>>, vector<1x8x128xf32>
    %126 = vector.shape_cast %125 : vector<1x8x128xf32> to vector<8x128xf32>
    %127 = arith.subf %124, %126 : vector<8x128xf32>
    %128 = arith.mulf %127, %127 : vector<8x128xf32>
    %129 = arith.addf %122, %128 : vector<8x128xf32>
    %c2 = arith.constant 2 : index
    %c0_64 = arith.constant 0 : index
    %c0_65 = arith.constant 0 : index
    %130 = vector.load %arg2[%c2, %c0_64, %c0_65] : memref<14x8x128xf32, #tpu.memory_space<vmem>>, vector<1x8x128xf32>
    %131 = vector.shape_cast %130 : vector<1x8x128xf32> to vector<8x128xf32>
    %c2_66 = arith.constant 2 : index
    %c0_67 = arith.constant 0 : index
    %c0_68 = arith.constant 0 : index
    %132 = vector.load %arg3[%c2_66, %c0_67, %c0_68] : memref<9x8x128xf32, #tpu.memory_space<vmem>>, vector<1x8x128xf32>
    %133 = vector.shape_cast %132 : vector<1x8x128xf32> to vector<8x128xf32>
    %134 = arith.subf %131, %133 : vector<8x128xf32>
    %135 = arith.mulf %134, %134 : vector<8x128xf32>
    %136 = arith.addf %129, %135 : vector<8x128xf32>
    %c3 = arith.constant 3 : index
    %c0_69 = arith.constant 0 : index
    %c0_70 = arith.constant 0 : index
    %137 = vector.load %arg2[%c3, %c0_69, %c0_70] : memref<14x8x128xf32, #tpu.memory_space<vmem>>, vector<1x8x128xf32>
    %138 = vector.shape_cast %137 : vector<1x8x128xf32> to vector<8x128xf32>
    %c3_71 = arith.constant 3 : index
    %c0_72 = arith.constant 0 : index
    %c0_73 = arith.constant 0 : index
    %139 = vector.load %arg3[%c3_71, %c0_72, %c0_73] : memref<9x8x128xf32, #tpu.memory_space<vmem>>, vector<1x8x128xf32>
    %140 = vector.shape_cast %139 : vector<1x8x128xf32> to vector<8x128xf32>
    %141 = arith.subf %138, %140 : vector<8x128xf32>
    %142 = arith.mulf %141, %141 : vector<8x128xf32>
    %143 = arith.addf %136, %142 : vector<8x128xf32>
    %144 = arith.mulf %4, %143 : vector<8x128xf32>
    %c0_74 = arith.constant 0 : index
    %c0_75 = arith.constant 0 : index
    %145 = vector.load %arg6[%c0_74, %c0_75] : memref<4x128xf32, #tpu.memory_space<vmem>>, vector<1x128xf32>
    %cst_76 = arith.constant dense<0.000000e+00> : vector<128xf32>
    %146 = vector.multi_reduction <add>, %105, %cst_76 [0] : vector<8x128xf32> to vector<128xf32>
    %147 = vector.shape_cast %146 : vector<128xf32> to vector<1x128xf32>
    %148 = arith.addf %145, %147 : vector<1x128xf32>
    %c0_77 = arith.constant 0 : index
    %c0_78 = arith.constant 0 : index
    %149 = vector.load %arg6[%c0_77, %c0_78] : memref<4x128xf32, #tpu.memory_space<vmem>>, vector<1x128xf32>
    tpu.vector_store %arg6[%c0_77, %c0_78], %148 {strides = array<i32>} : memref<4x128xf32, #tpu.memory_space<vmem>>, vector<1x128xf32>,
    %c1_79 = arith.constant 1 : index
    %c0_80 = arith.constant 0 : index
    %150 = vector.load %arg6[%c1_79, %c0_80] : memref<4x128xf32, #tpu.memory_space<vmem>>, vector<1x128xf32>
    %cst_81 = arith.constant dense<0.000000e+00> : vector<128xf32>
    %151 = vector.multi_reduction <add>, %109, %cst_81 [0] : vector<8x128xf32> to vector<128xf32>
    %152 = vector.shape_cast %151 : vector<128xf32> to vector<1x128xf32>
    %153 = arith.addf %150, %152 : vector<1x128xf32>
    %c1_82 = arith.constant 1 : index
    %c0_83 = arith.constant 0 : index
    %154 = vector.load %arg6[%c1_82, %c0_83] : memref<4x128xf32, #tpu.memory_space<vmem>>, vector<1x128xf32>
    tpu.vector_store %arg6[%c1_82, %c0_83], %153 {strides = array<i32>} : memref<4x128xf32, #tpu.memory_space<vmem>>, vector<1x128xf32>,
    %c2_84 = arith.constant 2 : index
    %c0_85 = arith.constant 0 : index
    %155 = vector.load %arg6[%c2_84, %c0_85] : memref<4x128xf32, #tpu.memory_space<vmem>>, vector<1x128xf32>
    %cst_86 = arith.constant dense<0.000000e+00> : vector<128xf32>
    %156 = vector.multi_reduction <add>, %114, %cst_86 [0] : vector<8x128xf32> to vector<128xf32>
    %157 = vector.shape_cast %156 : vector<128xf32> to vector<1x128xf32>
    %158 = arith.addf %155, %157 : vector<1x128xf32>
    %c2_87 = arith.constant 2 : index
    %c0_88 = arith.constant 0 : index
    %159 = vector.load %arg6[%c2_87, %c0_88] : memref<4x128xf32, #tpu.memory_space<vmem>>, vector<1x128xf32>
    tpu.vector_store %arg6[%c2_87, %c0_88], %158 {strides = array<i32>} : memref<4x128xf32, #tpu.memory_space<vmem>>, vector<1x128xf32>,
    %c3_89 = arith.constant 3 : index
    %c0_90 = arith.constant 0 : index
    %160 = vector.load %arg6[%c3_89, %c0_90] : memref<4x128xf32, #tpu.memory_space<vmem>>, vector<1x128xf32>
    %cst_91 = arith.constant dense<0.000000e+00> : vector<128xf32>
    %161 = vector.multi_reduction <add>, %144, %cst_91 [0] : vector<8x128xf32> to vector<128xf32>
    %162 = vector.shape_cast %161 : vector<128xf32> to vector<1x128xf32>
    %163 = arith.addf %160, %162 : vector<1x128xf32>
    %c3_92 = arith.constant 3 : index
    %c0_93 = arith.constant 0 : index
    %164 = vector.load %arg6[%c3_92, %c0_93] : memref<4x128xf32, #tpu.memory_space<vmem>>, vector<1x128xf32>
    tpu.vector_store %arg6[%c3_92, %c0_93], %163 {strides = array<i32>} : memref<4x128xf32, #tpu.memory_space<vmem>>, vector<1x128xf32>,
    %c0_i32_94 = arith.constant 0 : i32
    %165 = arith.cmpi eq, %arg1, %c0_i32_94 : i32
    %166 = arith.extui %165 : i1 to i32
    %cst_95 = arith.constant 0.000000e+00 : f32
    %c0_i32_96 = arith.constant 0 : i32
    %167 = arith.cmpi ne, %166, %c0_i32_96 : i32
    scf.if %167 {
      %c0_97 = arith.constant 0 : index
      %c0_98 = arith.constant 0 : index
      %168 = vector.load %arg6[%c0_97, %c0_98] : memref<4x128xf32, #tpu.memory_space<vmem>>, vector<1x128xf32>
      %169 = vector.shape_cast %168 : vector<1x128xf32> to vector<1x1x128xf32>
      %cst_99 = arith.constant dense<0.000000e+00> : vector<1xf32>
      %170 = vector.multi_reduction <add>, %169, %cst_99 [1, 2] : vector<1x1x128xf32> to vector<1xf32>
      %171 = vector.shape_cast %170 : vector<1xf32> to vector<1x1x1xf32>
      %172 = vector.extract %171[0, 0, 0] : f32 from vector<1x1x1xf32>
      %cst_100 = arith.constant 5.000000e-01 : f32
      %173 = arith.mulf %172, %cst_100 : f32
      %c1_101 = arith.constant 1 : index
      %c0_102 = arith.constant 0 : index
      %174 = vector.load %arg6[%c1_101, %c0_102] : memref<4x128xf32, #tpu.memory_space<vmem>>, vector<1x128xf32>
      %175 = vector.shape_cast %174 : vector<1x128xf32> to vector<1x1x128xf32>
      %cst_103 = arith.constant dense<0.000000e+00> : vector<1xf32>
      %176 = vector.multi_reduction <add>, %175, %cst_103 [1, 2] : vector<1x1x128xf32> to vector<1xf32>
      %177 = vector.shape_cast %176 : vector<1xf32> to vector<1x1x1xf32>
      %178 = vector.extract %177[0, 0, 0] : f32 from vector<1x1x1xf32>
      %cst_104 = arith.constant 5.000000e-01 : f32
      %179 = arith.mulf %178, %cst_104 : f32
      %c2_105 = arith.constant 2 : index
      %c0_106 = arith.constant 0 : index
      %180 = vector.load %arg6[%c2_105, %c0_106] : memref<4x128xf32, #tpu.memory_space<vmem>>, vector<1x128xf32>
      %181 = vector.shape_cast %180 : vector<1x128xf32> to vector<1x1x128xf32>
      %cst_107 = arith.constant dense<0.000000e+00> : vector<1xf32>
      %182 = vector.multi_reduction <add>, %181, %cst_107 [1, 2] : vector<1x1x128xf32> to vector<1xf32>
      %183 = vector.shape_cast %182 : vector<1xf32> to vector<1x1x1xf32>
      %184 = vector.extract %183[0, 0, 0] : f32 from vector<1x1x1xf32>
      %cst_108 = arith.constant 5.000000e-01 : f32
      %185 = arith.mulf %184, %cst_108 : f32
      %c3_109 = arith.constant 3 : index
      %c0_110 = arith.constant 0 : index
      %186 = vector.load %arg6[%c3_109, %c0_110] : memref<4x128xf32, #tpu.memory_space<vmem>>, vector<1x128xf32>
      %187 = vector.shape_cast %186 : vector<1x128xf32> to vector<1x1x128xf32>
      %cst_111 = arith.constant dense<0.000000e+00> : vector<1xf32>
      %188 = vector.multi_reduction <add>, %187, %cst_111 [1, 2] : vector<1x1x128xf32> to vector<1xf32>
      %189 = vector.shape_cast %188 : vector<1xf32> to vector<1x1x1xf32>
      %190 = vector.extract %189[0, 0, 0] : f32 from vector<1x1x1xf32>
      %cst_112 = arith.constant 5.000000e-01 : f32
      %191 = arith.mulf %190, %cst_112 : f32
      %cst_113 = arith.constant 5.000000e+00 : f32
      %192 = arith.mulf %173, %cst_113 : f32
      %cst_114 = arith.constant 1.000000e+00 : f32
      %193 = arith.mulf %179, %cst_114 : f32
      %194 = arith.addf %192, %193 : f32
      %cst_115 = arith.constant 5.000000e-01 : f32
      %195 = arith.mulf %185, %cst_115 : f32
      %196 = arith.addf %194, %195 : f32
      %cst_116 = arith.constant 1.000000e+00 : f32
      %197 = arith.mulf %191, %cst_116 : f32
      %198 = arith.addf %196, %197 : f32
      %199 = tpu.iota {dimensions = array<i32: 2>} : vector<1x8x128xi32>
      %c0_i32_117 = arith.constant 0 : i32
      %200 = vector.broadcast %c0_i32_117 : i32 to vector<1x8x128xi32>
      %201 = arith.cmpi eq, %199, %200 : vector<1x8x128xi32>
      %c1_i32 = arith.constant 1 : i32
      %202 = vector.broadcast %c1_i32 : i32 to vector<1x8x128xi32>
      %203 = arith.cmpi eq, %199, %202 : vector<1x8x128xi32>
      %c2_i32 = arith.constant 2 : i32
      %204 = vector.broadcast %c2_i32 : i32 to vector<1x8x128xi32>
      %205 = arith.cmpi eq, %199, %204 : vector<1x8x128xi32>
      %c3_i32 = arith.constant 3 : i32
      %206 = vector.broadcast %c3_i32 : i32 to vector<1x8x128xi32>
      %207 = arith.cmpi eq, %199, %206 : vector<1x8x128xi32>
      %c4_i32 = arith.constant 4 : i32
      %208 = vector.broadcast %c4_i32 : i32 to vector<1x8x128xi32>
      %209 = arith.cmpi eq, %199, %208 : vector<1x8x128xi32>
      %210 = vector.broadcast %191 : f32 to vector<1x8x128xf32>
      %211 = vector.broadcast %cst_95 : f32 to vector<1x8x128xf32>
      %212 = arith.select %209, %210, %211 : vector<1x8x128xi1>, vector<1x8x128xf32>
      %213 = vector.broadcast %185 : f32 to vector<1x8x128xf32>
      %214 = arith.select %207, %213, %212 : vector<1x8x128xi1>, vector<1x8x128xf32>
      %215 = vector.broadcast %179 : f32 to vector<1x8x128xf32>
      %216 = arith.select %205, %215, %214 : vector<1x8x128xi1>, vector<1x8x128xf32>
      %217 = vector.broadcast %173 : f32 to vector<1x8x128xf32>
      %218 = arith.select %203, %217, %216 : vector<1x8x128xi1>, vector<1x8x128xf32>
      %219 = vector.broadcast %198 : f32 to vector<1x8x128xf32>
      %220 = arith.select %201, %219, %218 : vector<1x8x128xi1>, vector<1x8x128xf32>
      %c0_118 = arith.constant 0 : index
      %c0_119 = arith.constant 0 : index
      %c0_120 = arith.constant 0 : index
      %221 = vector.load %arg5[%c0_118, %c0_119, %c0_120] : memref<1x8x128xf32, #tpu.memory_space<vmem>>, vector<1x8x128xf32>
      tpu.vector_store %arg5[%c0_118, %c0_119, %c0_120], %220 {strides = array<i32>} : memref<1x8x128xf32, #tpu.memory_space<vmem>>, vector<1x8x128xf32>,
    } else {
    }
    return
  }
  func.func @transform_0(%arg0: i32, %arg1: i32) -> (i32, i32, i32) {
    %c1_i32 = arith.constant 1 : i32
    %0 = arith.muli %arg0, %c1_i32 : i32
    %1 = arith.addi %0, %arg1 : i32
    %c0_i32 = arith.constant 0 : i32
    %c0_i32_0 = arith.constant 0 : i32
    %c0_i32_1 = arith.constant 0 : i32
    return %c0_i32, %1, %c0_i32_0 : i32, i32, i32
  }
  func.func @transform_1(%arg0: i32, %arg1: i32) -> (i32, i32, i32) {
    %c1_i32 = arith.constant 1 : i32
    %0 = arith.muli %arg0, %c1_i32 : i32
    %1 = arith.addi %0, %arg1 : i32
    %c0_i32 = arith.constant 0 : i32
    %c0_i32_0 = arith.constant 0 : i32
    %c0_i32_1 = arith.constant 0 : i32
    return %c0_i32, %1, %c0_i32_0 : i32, i32, i32
  }
  func.func @transform_2(%arg0: i32, %arg1: i32) -> (i32, i32, i32) {
    %c1_i32 = arith.constant 1 : i32
    %0 = arith.muli %arg0, %c1_i32 : i32
    %1 = arith.addi %0, %arg1 : i32
    %c0_i32 = arith.constant 0 : i32
    %c0_i32_0 = arith.constant 0 : i32
    %c0_i32_1 = arith.constant 0 : i32
    return %c0_i32, %1, %c0_i32_0 : i32, i32, i32
  }
  func.func @transform_3(%arg0: i32, %arg1: i32) -> (i32, i32, i32) {
    %c0_i32 = arith.constant 0 : i32
    %c0_i32_0 = arith.constant 0 : i32
    %c0_i32_1 = arith.constant 0 : i32
    return %arg0, %c0_i32, %c0_i32_0 : i32, i32, i32
  }
}

</mosaic_0001>

<llo_original>
// kernel: yolo_v1_loss.1
$region0: #{yolo_v1_loss.1}
  #allocation0 [shape = 'u32[]', space=smem, size = 0x4, offset = 0x4, fixed_abs, tag = 'smem constant byte address 0x4 - core index']
  #allocation1 [shape = 'u32[144,128]{1,0:T(1,128)}', space=vmem, size = 0x12000, scoped, tag = 'internal scratch']
  #allocation2 [shape = 'f32[4,128]{1,0:T(4,128)}', space=vmem, size = 0x800, scoped, tag = 'scratch operand']
  %s0 = inlined_call_operand.vmem [shape: f32[14,8,128], index: 0, kind: input, shape index: {}]
  %s1 = inlined_call_operand.vmem [shape: f32[9,8,128], index: 1, kind: input, shape index: {}]
  %s2 = inlined_call_operand.vmem [shape: f32[2,8,128], index: 2, kind: input, shape index: {}]
  %s3 = inlined_call_operand.vmem [shape: f32[1,8,128], index: 3, kind: output, shape index: {}]
  %s4 = sld [smem:[#allocation0]]
  $region30: #{yolo_v1_loss.1} parent=0
    _
  %s6 = ssub.s32 1, %s4
  %s7 = scalar_select 0, %s6, %s4
  // Predicated region
  $region2: #{yolo_v1_loss.1} parent=0 // pred_check
    _
  $region3: #{yolo_v1_loss.1} parent=0 // pred_check_branch
    %9 = sbr.rel (0) target = $region5
  $region4: #{yolo_v1_loss.1} parent=0 // pred_region
    %s10 = sadd.s32 0, 0
    %p11 = scmp.lt.s32.totalorder %s10, 0
    %s12 = scalar_select %p11, %s10, 0
    %s13 = smul.addr %s12, 8
    %s14 = scalar_lea.vmem %s0, %s13
    %s15 = sadd.s32 0, 0
  $region5: #{yolo_v1_loss.1} parent=0 // pred_fallthru
    _
  // Predicated region
  $region6: #{yolo_v1_loss.1} parent=0 // pred_check
    _
  $region7: #{yolo_v1_loss.1} parent=0 // pred_check_branch
    %17 = sbr.rel (0) target = $region9
  $region8: #{yolo_v1_loss.1} parent=0 // pred_region
    %s18 = sadd.s32 0, 0
    %p19 = scmp.lt.s32.totalorder %s18, 0
    %s20 = scalar_select %p19, %s18, 0
    %s21 = smul.addr %s20, 8
    %s22 = scalar_lea.vmem %s1, %s21
    %s23 = sadd.s32 0, 0
  $region9: #{yolo_v1_loss.1} parent=0 // pred_fallthru
    _
  // Predicated region
  $region10: #{yolo_v1_loss.1} parent=0 // pred_check
    _
  $region11: #{yolo_v1_loss.1} parent=0 // pred_check_branch
    %25 = sbr.rel (0) target = $region13
  $region12: #{yolo_v1_loss.1} parent=0 // pred_region
    %s26 = sadd.s32 0, 0
    %p27 = scmp.lt.s32.totalorder %s26, 0
    %s28 = scalar_select %p27, %s26, 0
    %s29 = smul.addr %s28, 8
    %s30 = scalar_lea.vmem %s2, %s29
    %s31 = sadd.s32 0, 0
  $region13: #{yolo_v1_loss.1} parent=0 // pred_fallthru
    _
  %s32 = sadd.s32 0, 0
  %p33 = scmp.lt.s32.totalorder %s32, 0
  %s34 = scalar_select %p33, %s32, 0
  %s35 = smul.addr %s34, 8
  %s36 = scalar_lea.vmem %s0, %s35
  %s37 = sadd.s32 0, 0
  %p38 = scmp.lt.s32.totalorder %s37, 0
  %s39 = scalar_select %p38, %s37, 0
  %s40 = smul.addr %s39, 8
  %s41 = scalar_lea.vmem %s1, %s40
  %s42 = sadd.s32 0, 0
  %p43 = scmp.lt.s32.totalorder %s42, 0
  %s44 = scalar_select %p43, %s42, 0
  %s45 = smul.addr %s44, 8
  %s46 = scalar_lea.vmem %s2, %s45
  %s47 = sadd.s32 0, 0
  %p48 = scmp.lt.s32.totalorder %s47, 0
  %s49 = scalar_select %p48, %s47, 0
  %s50 = smul.addr %s49, 8
  %s51 = scalar_lea.vmem %s0, %s50
  %s52 = sadd.s32 0, 0
  %s53 = sadd.s32 0, 0
  %p54 = scmp.lt.s32.totalorder %s53, 0
  %s55 = scalar_select %p54, %s53, 0
  %s56 = smul.addr %s55, 8
  %s57 = scalar_lea.vmem %s1, %s56
  %s58 = sadd.s32 0, 0
  %s59 = sadd.s32 0, 0
  %p60 = scmp.lt.s32.totalorder %s59, 0
  %s61 = scalar_select %p60, %s59, 0
  %s62 = smul.addr %s61, 8
  %s63 = scalar_lea.vmem %s2, %s62
  %s64 = sadd.s32 0, 0
  %p65 = scmp.eq.s32.totalorder 0, 0
  // Predicated region
  $region14: #{yolo_v1_loss.1} parent=0 // pred_check
    %p66 = pneg %p65
  $region15: #{yolo_v1_loss.1} parent=0 // pred_check_branch
    %68 = sbr.rel (%p66) target = $region17
  $region16: #{yolo_v1_loss.1} parent=0 // pred_region
    %69 = vst [vmem:[#allocation2] sm:$0xf] 0.0
  $region17: #{yolo_v1_loss.1} parent=0 // pred_fallthru
    _
  %s70 = scalar_lea.vmem %s57, 32
  %v71 = vld [vmem:[%s70] sm:$0xff]
  %v72 = vld [vmem:[%s63] sm:$0xff]
  %s73 = scalar_lea.vmem %s63, 8
  %v74 = vld [vmem:[%s73] sm:$0xff]
  %v75 = vmax.f32 %v72, %v74
  %vm76 = vcmp.ge.f32.partialorder %v72, %v75
  %vm77 = vcmp.lt.f32.partialorder 0.0, 0.5
  %vm78 = vmand %vm76, %vm77
  %v79 = vsel %vm78, 1.0, 0.0
  %v80 = vadd.f32 %v79, 0.0
  %v81 = vmul.f32 %v79, %v71
  %vm82 = vcmp.ge.f32.partialorder %v74, %v75
  %vm83 = vcmp.lt.f32.partialorder %v80, 0.5
  %vm84 = vmand %vm82, %vm83
  %v85 = vsel %vm84, 1.0, 0.0
  %v86 = vmul.f32 %v85, %v71
  %s87 = scalar_lea.vmem %s57, 40
  %v88 = vld [vmem:[%s87] sm:$0xff]
  %s89 = scalar_lea.vmem %s57, 48
  %v90 = vld [vmem:[%s89] sm:$0xff]
  %s91 = scalar_lea.vmem %s57, 56
  %v92 = vld [vmem:[%s91] sm:$0xff]
  %v93 = vand.u32 2147483647, %v92
  %v94 = vrsqrt.pop %v93
  %v95 = vmul.f32 %v93, %v94
  %vm96 = vcmp.eq.f32.partialorder %v93, inf
  %v97 = vsel %vm96, %v93, %v95
  %vm98 = vcmp.eq.f32.partialorder %v93, 0.0
  %v99 = vand.u32 %v93, 2147483648
  %v100 = vsel %vm98, %v99, %v97
  %s101 = scalar_lea.vmem %s57, 64
  %v102 = vld [vmem:[%s101] sm:$0xff]
  %v103 = vand.u32 2147483647, %v102
  %v104 = vrsqrt.pop %v103
  %v105 = vmul.f32 %v103, %v104
  %vm106 = vcmp.eq.f32.partialorder %v103, inf
  %v107 = vsel %vm106, %v103, %v105
  %vm108 = vcmp.eq.f32.partialorder %v103, 0.0
  %v109 = vand.u32 %v103, 2147483648
  %v110 = vsel %vm108, %v109, %v107
  %s111 = scalar_lea.vmem %s51, 32
  %v112 = vld [vmem:[%s111] sm:$0xff]
  %s113 = scalar_lea.vmem %s51, 40
  %v114 = vld [vmem:[%s113] sm:$0xff]
  %s115 = scalar_lea.vmem %s51, 48
  %v116 = vld [vmem:[%s115] sm:$0xff]
  %s117 = scalar_lea.vmem %s51, 56
  %v118 = vld [vmem:[%s117] sm:$0xff]
  %v119 = vand.u32 2147483647, %v118
  %v120 = vrsqrt.pop %v119
  %v121 = vmul.f32 %v119, %v120
  %vm122 = vcmp.eq.f32.partialorder %v119, inf
  %v123 = vsel %vm122, %v119, %v121
  %vm124 = vcmp.eq.f32.partialorder %v119, 0.0
  %v125 = vand.u32 %v119, 2147483648
  %v126 = vsel %vm124, %v125, %v123
  %s127 = scalar_lea.vmem %s51, 64
  %v128 = vld [vmem:[%s127] sm:$0xff]
  %v129 = vand.u32 2147483647, %v128
  %v130 = vrsqrt.pop %v129
  %v131 = vmul.f32 %v129, %v130
  %vm132 = vcmp.eq.f32.partialorder %v129, inf
  %v133 = vsel %vm132, %v129, %v131
  %vm134 = vcmp.eq.f32.partialorder %v129, 0.0
  %v135 = vand.u32 %v129, 2147483648
  %v136 = vsel %vm134, %v135, %v133
  %v137 = vsub.f32 %v114, %v88
  %v138 = vmul.f32 %v137, %v137
  %v139 = vsub.f32 %v116, %v90
  %v140 = vmul.f32 %v139, %v139
  %v141 = vadd.f32 %v138, %v140
  %v142 = vsub.f32 %v126, %v100
  %v143 = vmul.f32 %v142, %v142
  %v144 = vadd.f32 %v141, %v143
  %v145 = vsub.f32 %v136, %v110
  %v146 = vmul.f32 %v145, %v145
  %v147 = vadd.f32 %v144, %v146
  %v148 = vmul.f32 %v81, %v147
  %v149 = vadd.f32 %v148, 0.0
  %v150 = vsub.f32 %v112, %v72
  %v151 = vmul.f32 %v150, %v150
  %v152 = vmul.f32 %v81, %v151
  %v153 = vadd.f32 %v152, 0.0
  %v154 = vsub.f32 1.0, %v81
  %v155 = vmul.f32 %v112, %v112
  %v156 = vmul.f32 %v154, %v155
  %v157 = vadd.f32 %v156, 0.0
  %s158 = scalar_lea.vmem %s51, 72
  %v159 = vld [vmem:[%s158] sm:$0xff]
  %s160 = scalar_lea.vmem %s51, 80
  %v161 = vld [vmem:[%s160] sm:$0xff]
  %s162 = scalar_lea.vmem %s51, 88
  %v163 = vld [vmem:[%s162] sm:$0xff]
  %s164 = scalar_lea.vmem %s51, 96
  %v165 = vld [vmem:[%s164] sm:$0xff]
  %v166 = vand.u32 2147483647, %v165
  %v167 = vrsqrt.pop %v166
  %v168 = vmul.f32 %v166, %v167
  %vm169 = vcmp.eq.f32.partialorder %v166, inf
  %v170 = vsel %vm169, %v166, %v168
  %vm171 = vcmp.eq.f32.partialorder %v166, 0.0
  %v172 = vand.u32 %v166, 2147483648
  %v173 = vsel %vm171, %v172, %v170
  %s174 = scalar_lea.vmem %s51, 104
  %v175 = vld [vmem:[%s174] sm:$0xff]
  %v176 = vand.u32 2147483647, %v175
  %v177 = vrsqrt.pop %v176
  %v178 = vmul.f32 %v176, %v177
  %vm179 = vcmp.eq.f32.partialorder %v176, inf
  %v180 = vsel %vm179, %v176, %v178
  %vm181 = vcmp.eq.f32.partialorder %v176, 0.0
  %v182 = vand.u32 %v176, 2147483648
  %v183 = vsel %vm181, %v182, %v180
  %v184 = vsub.f32 %v161, %v88
  %v185 = vmul.f32 %v184, %v184
  %v186 = vsub.f32 %v163, %v90
  %v187 = vmul.f32 %v186, %v186
  %v188 = vadd.f32 %v185, %v187
  %v189 = vsub.f32 %v173, %v100
  %v190 = vmul.f32 %v189, %v189
  %v191 = vadd.f32 %v188, %v190
  %v192 = vsub.f32 %v183, %v110
  %v193 = vmul.f32 %v192, %v192
  %v194 = vadd.f32 %v191, %v193
  %v195 = vmul.f32 %v86, %v194
  %v196 = vadd.f32 %v149, %v195
  %v197 = vsub.f32 %v159, %v74
  %v198 = vmul.f32 %v197, %v197
  %v199 = vmul.f32 %v86, %v198
  %v200 = vadd.f32 %v153, %v199
  %v201 = vsub.f32 1.0, %v86
  %v202 = vmul.f32 %v159, %v159
  %v203 = vmul.f32 %v201, %v202
  %v204 = vadd.f32 %v157, %v203
  %v205 = vld [vmem:[%s51] sm:$0xff]
  %v206 = vld [vmem:[%s57] sm:$0xff]
  %v207 = vsub.f32 %v205, %v206
  %v208 = vmul.f32 %v207, %v207
  %v209 = vadd.f32 %v208, 0.0
  %s210 = scalar_lea.vmem %s51, 8
  %v211 = vld [vmem:[%s210] sm:$0xff]
  %s212 = scalar_lea.vmem %s57, 8
  %v213 = vld [vmem:[%s212] sm:$0xff]
  %v214 = vsub.f32 %v211, %v213
  %v215 = vmul.f32 %v214, %v214
  %v216 = vadd.f32 %v209, %v215
  %s217 = scalar_lea.vmem %s51, 16
  %v218 = vld [vmem:[%s217] sm:$0xff]
  %s219 = scalar_lea.vmem %s57, 16
  %v220 = vld [vmem:[%s219] sm:$0xff]
  %v221 = vsub.f32 %v218, %v220
  %v222 = vmul.f32 %v221, %v221
  %v223 = vadd.f32 %v216, %v222
  %s224 = scalar_lea.vmem %s51, 24
  %v225 = vld [vmem:[%s224] sm:$0xff]
  %s226 = scalar_lea.vmem %s57, 24
  %v227 = vld [vmem:[%s226] sm:$0xff]
  %v228 = vsub.f32 %v225, %v227
  %v229 = vmul.f32 %v228, %v228
  %v230 = vadd.f32 %v223, %v229
  %v231 = vmul.f32 %v71, %v230
  %v232 = vld [vmem:[#allocation2] sm:$0x1]
  %v233 = vrot.slane %v196, 4
  %v234 = vadd.f32 %v196, %v233
  %v235 = vrot.slane %v234, 2
  %v236 = vadd.f32 %v234, %v235
  %v237 = vrot.slane %v236, 1
  %v238 = vadd.f32 %v236, %v237
  %v239 = vadd.f32 %v232, %v238
  %240 = vst [vmem:[#allocation2] sm:$0x1] %v239
  %v241 = vld [vmem:[#allocation2 + $0x1] sm:$0x1]
  %v242 = vrot.slane %v200, 4
  %v243 = vadd.f32 %v200, %v242
  %v244 = vrot.slane %v243, 2
  %v245 = vadd.f32 %v243, %v244
  %v246 = vrot.slane %v245, 1
  %v247 = vadd.f32 %v245, %v246
  %v248 = vadd.f32 %v241, %v247
  %249 = vst [vmem:[#allocation2 + $0x1] sm:$0x1] %v248
  %v250 = vld [vmem:[#allocation2 + $0x2] sm:$0x1]
  %v251 = vrot.slane %v204, 4
  %v252 = vadd.f32 %v204, %v251
  %v253 = vrot.slane %v252, 2
  %v254 = vadd.f32 %v252, %v253
  %v255 = vrot.slane %v254, 1
  %v256 = vadd.f32 %v254, %v255
  %v257 = vadd.f32 %v250, %v256
  %258 = vst [vmem:[#allocation2 + $0x2] sm:$0x1] %v257
  %v259 = vld [vmem:[#allocation2 + $0x3] sm:$0x1]
  %v260 = vrot.slane %v231, 4
  %v261 = vadd.f32 %v231, %v260
  %v262 = vrot.slane %v261, 2
  %v263 = vadd.f32 %v261, %v262
  %v264 = vrot.slane %v263, 1
  %v265 = vadd.f32 %v263, %v264
  %v266 = vadd.f32 %v259, %v265
  %267 = vst [vmem:[#allocation2 + $0x3] sm:$0x1] %v266
  // Predicated region
  $region18: #{yolo_v1_loss.1} parent=0 // pred_check
    %p268 = pneg %p65
  $region19: #{yolo_v1_loss.1} parent=0 // pred_check_branch
    %270 = sbr.rel (%p268) target = $region21
  $region20: #{yolo_v1_loss.1} parent=0 // pred_region
    %v271 = vld [vmem:[#allocation2] sm:$0x1]
    %vm272 = vcmask 1040384
    %v273 = vsel %vm272, %v271, 0.0
    %274 = vadd.xlane.f32.xlu0 %v273
    %v275 = vpop.xlane.xlu0 %274
    %v276 = vrot.slane %v275, 4
    %v277 = vadd.f32 %v275, %v276
    %v278 = vrot.slane %v277, 2
    %v279 = vadd.f32 %v277, %v278
    %v280 = vrot.slane %v279, 1
    %v281 = vadd.f32 %v279, %v280
    %s282 = vtos %v281
    %s283 = smul.f32 %s282, 0.5
    %v284 = vld [vmem:[#allocation2 + $0x1] sm:$0x1]
    %v285 = vsel %vm272, %v284, 0.0
    %286 = vadd.xlane.f32.xlu0 %v285
    %v287 = vpop.xlane.xlu0 %286
    %v288 = vrot.slane %v287, 4
    %v289 = vadd.f32 %v287, %v288
    %v290 = vrot.slane %v289, 2
    %v291 = vadd.f32 %v289, %v290
    %v292 = vrot.slane %v291, 1
    %v293 = vadd.f32 %v291, %v292
    %s294 = vtos %v293
    %s295 = smul.f32 %s294, 0.5
    %v296 = vld [vmem:[#allocation2 + $0x2] sm:$0x1]
    %v297 = vsel %vm272, %v296, 0.0
    %298 = vadd.xlane.f32.xlu0 %v297
    %v299 = vpop.xlane.xlu0 %298
    %v300 = vrot.slane %v299, 4
    %v301 = vadd.f32 %v299, %v300
    %v302 = vrot.slane %v301, 2
    %v303 = vadd.f32 %v301, %v302
    %v304 = vrot.slane %v303, 1
    %v305 = vadd.f32 %v303, %v304
    %s306 = vtos %v305
    %s307 = smul.f32 %s306, 0.5
    %v308 = vld [vmem:[#allocation2 + $0x3] sm:$0x1]
    %v309 = vsel %vm272, %v308, 0.0
    %310 = vadd.xlane.f32.xlu0 %v309
    %v311 = vpop.xlane.xlu0 %310
    %v312 = vrot.slane %v311, 4
    %v313 = vadd.f32 %v311, %v312
    %v314 = vrot.slane %v313, 2
    %v315 = vadd.f32 %v313, %v314
    %v316 = vrot.slane %v315, 1
    %v317 = vadd.f32 %v315, %v316
    %s318 = vtos %v317
    %s319 = smul.f32 %s318, 0.5
    %s320 = smul.f32 %s283, 5.0
    %s321 = sadd.f32 %s320, %s295
    %s322 = smul.f32 %s307, 0.5
    %s323 = sadd.f32 %s321, %s322
    %s324 = sadd.f32 %s323, %s319
    %v325 = vlaneseq
    %v326 = vand.u32 %v325, 127
    %vm327 = vcmp.eq.s32.totalorder %v326, 0
    %vm328 = vcmp.eq.s32.totalorder %v326, 1
    %vm329 = vcmp.eq.s32.totalorder %v326, 2
    %vm330 = vcmp.eq.s32.totalorder %v326, 3
    %vm331 = vcmp.eq.s32.totalorder %v326, 4
    %v332 = vstv %s319
    %v333 = vsel %vm331, %v332, 0.0
    %v334 = vstv %s307
    %v335 = vsel %vm330, %v334, %v333
    %v336 = vstv %s295
    %v337 = vsel %vm329, %v336, %v335
    %v338 = vstv %s283
    %v339 = vsel %vm328, %v338, %v337
    %v340 = vstv %s324
    %v341 = vsel %vm327, %v340, %v339
    %342 = vst [vmem:[%s3] sm:$0xff] %v341
  $region21: #{yolo_v1_loss.1} parent=0 // pred_fallthru
    _
  // Predicated region
  $region22: #{yolo_v1_loss.1} parent=0 // pred_check
    _
  $region23: #{yolo_v1_loss.1} parent=0 // pred_check_branch
    %344 = sbr.rel (0) target = $region25
  $region24: #{yolo_v1_loss.1} parent=0 // pred_region
    _
  $region25: #{yolo_v1_loss.1} parent=0 // pred_fallthru
    _
  // Predicated region
  $region26: #{yolo_v1_loss.1} parent=0 // pred_check
    _
  $region27: #{yolo_v1_loss.1} parent=0 // pred_check_branch
    %346 = sbr.rel (0) target = $region29
  $region28: #{yolo_v1_loss.1} parent=0 // pred_region
    _
  $region29: #{yolo_v1_loss.1} parent=0 // pred_fallthru
    _

</llo_original>
